<compile_context>
chip_gen: v6e
topology: v6e:2x2x1
jax: 0.10.0
libtpu: 0.0.40
codegen_flags: <defaults>
</compile_context>

<pallas_src>
import functools

import jax
import jax.numpy as jnp
from jax.experimental import pallas as pl
from jax.experimental.pallas import tpu as pltpu


def _round_up(n, m):
    return ((n + m - 1) // m) * m


# ---------------------------------------------------------------------------
# One-time parameter prep (hoisted out of the per-call path).
# ---------------------------------------------------------------------------
def prepare_params(w1, b1, w2, b2, compute_dtype=None):
    """Pad hidden/output dims to lane-dense multiples of 128 and cast once.

    Call this ONCE and reuse the returned arrays; the kernel then reads the
    padded (optionally bf16) weights straight from HBM on every call with no
    per-call pad/astype XLA passes. Biases stay f32 (added post-MXU in f32).
    """
    H = w1.shape[1]
    n_out = w2.shape[1]
    cdt = jnp.dtype(compute_dtype) if compute_dtype is not None else w1.dtype
    H_pad = _round_up(H, 128)
    N_pad = _round_up(n_out, 128)

    w1p = jnp.pad(w1, ((0, 0), (0, H_pad - H))).astype(cdt)
    b1p = jnp.pad(b1.reshape(1, -1), ((0, 0), (0, H_pad - H))).astype(jnp.float32)
    w2p = jnp.pad(w2, ((0, H_pad - H), (0, N_pad - n_out))).astype(cdt)
    b2p = jnp.pad(b2.reshape(1, -1), ((0, 0), (0, N_pad - n_out))).astype(jnp.float32)
    return w1p, b1p, w2p, b2p


# ---------------------------------------------------------------------------
# Kernel
# ---------------------------------------------------------------------------
def _mlp_kernel(x_ref, w1_ref, b1_ref, w2_ref, b2_ref, o_ref):
    # x_ref: (TB, D_in)  w1_ref: (D_in, Hp)  b1_ref: (1, Hp)
    # w2_ref: (Hp, Np)   b2_ref: (1, Np)     o_ref: (TB, Np)
    x = x_ref[...].astype(w1_ref.dtype)  # in-kernel cast (no-op on f32 path)
    h = jnp.dot(x, w1_ref[...], preferred_element_type=jnp.float32)
    h = jnp.maximum(h + b1_ref[...], 0.0)           # bias + ReLU in f32
    # Dropout(p=0.1): identity at inference time.
    # TODO(synk): training-mode dropout (pltpu.prng_seed with a step-dependent
    # seed + mask / scale by 1/0.9) not implemented.
    out = jnp.dot(h.astype(w2_ref.dtype), w2_ref[...],
                  preferred_element_type=jnp.float32)
    out = out + b2_ref[...]
    o_ref[...] = out.astype(o_ref.dtype)


# ---------------------------------------------------------------------------
# Wrapper
# ---------------------------------------------------------------------------
@functools.partial(jax.jit, static_argnames=("num_classes", "tile_b"))
def unstructured_classifier(x, w1p, b1p, w2p, b2p, *, num_classes=2, tile_b=256):
    """Linear(D_in->H) -> ReLU -> Dropout(eval: identity) -> Linear(H->n_out).

    `w1p/b1p/w2p/b2p` must come from `prepare_params` (lane-padded, optionally
    bf16). Output dtype matches x; returns (B, num_classes).
    """
    B, D_in = x.shape
    H_pad = w1p.shape[1]
    N_pad = w2p.shape[1]
    out_dtype = x.dtype

    pack = 8  # sublane packing for the (f32) x tile's batch axis

    # ---- batch tiling: no x padding; ragged last block is masked by Pallas.
    # Rows are independent, so garbage OOB input rows cannot contaminate
    # valid output rows, and OOB output stores are masked.
    if B <= pack:
        tb = B  # single full-array block
    else:
        # >= 2 grid steps so v7x megacore actually splits the batch axis,
        # while choosing tb to minimize the last-block remainder.
        n_steps = max(pl.cdiv(B, tile_b), 2)
        tb = _round_up(pl.cdiv(B, n_steps), pack)

    # ---- VMEM footprint (bytes): 2x-buffered x/out tiles, single-buffered
    # resident weights, f32 hidden intermediate. Shrink tb if it would not fit
    # the smallest physical VMEM (v7x: 64 MiB) with headroom.
    def _footprint(tb_):
        return (2 * tb_ * D_in * x.dtype.itemsize
                + 2 * tb_ * N_pad * jnp.dtype(out_dtype).itemsize
                + D_in * H_pad * w1p.dtype.itemsize
                + H_pad * N_pad * w2p.dtype.itemsize
                + (H_pad + N_pad) * 4
                + tb_ * H_pad * 4)

    while tb > pack and _footprint(tb) > 48 * 1024 * 1024:
        tb = max(_round_up(tb // 2, pack), pack)

    vmem_limit = min(max(int(_footprint(tb) * 1.5) + (2 << 20), 16 << 20),
                     100 * 1024 * 1024)

    grid = (pl.cdiv(B, tb),)

    flops = 2 * B * (D_in * H_pad + H_pad * N_pad)
    bytes_accessed = (
        B * D_in * x.dtype.itemsize
        + D_in * H_pad * w1p.dtype.itemsize + H_pad * 4
        + H_pad * N_pad * w2p.dtype.itemsize + N_pad * 4
        + B * N_pad * jnp.dtype(out_dtype).itemsize
    )

    resident = dict(pipeline_mode=pl.Buffered(1))  # DMA'd once; single buffer

    out_padded = pl.pallas_call(
        _mlp_kernel,
        out_shape=jax.ShapeDtypeStruct((B, N_pad), out_dtype),
        grid_spec=pltpu.PrefetchScalarGridSpec(
            num_scalar_prefetch=0,
            grid=grid,
            in_specs=[
                pl.BlockSpec((tb, D_in), lambda i: (i, 0)),              # x tile (pipelined)
                pl.BlockSpec((D_in, H_pad), lambda i: (0, 0), **resident),  # W1 (resident)
                pl.BlockSpec((1, H_pad), lambda i: (0, 0), **resident),     # b1 (resident)
                pl.BlockSpec((H_pad, N_pad), lambda i: (0, 0), **resident), # W2 (resident)
                pl.BlockSpec((1, N_pad), lambda i: (0, 0), **resident),     # b2 (resident)
            ],
            out_specs=pl.BlockSpec((tb, N_pad), lambda i: (i, 0)),
        ),
        compiler_params=pltpu.CompilerParams(
            dimension_semantics=("parallel",),   # batch tiles shard over v7x's 2 TCs
            vmem_limit_bytes=vmem_limit,
        ),
        cost_estimate=pl.CostEstimate(
            flops=flops, transcendentals=0, bytes_accessed=bytes_accessed),
    )(x, w1p, b1p, w2p, b2p)

    return out_padded[:, :num_classes]


# ---------------------------------------------------------------------------
# Deterministic PyTorch-nn.Linear-style init (U(-1/sqrt(fan_in), 1/sqrt(fan_in)))
# ---------------------------------------------------------------------------
def init_params(key, input_size, hidden_size, num_classes=2, dtype=jnp.float32):
    k1, k2, k3, k4 = jax.random.split(key, 4)
    bound1 = 1.0 / jnp.sqrt(jnp.asarray(input_size, dtype))
    bound2 = 1.0 / jnp.sqrt(jnp.asarray(hidden_size, dtype))
    # stored as (in, out) for the kernel's x @ W convention
    w1 = jax.random.uniform(k1, (input_size, hidden_size), dtype, -bound1, bound1)
    b1 = jax.random.uniform(k2, (1, hidden_size), dtype, -bound1, bound1)
    w2 = jax.random.uniform(k3, (hidden_size, num_classes), dtype, -bound2, bound2)
    b2 = jax.random.uniform(k4, (1, num_classes), dtype, -bound2, bound2)
    return w1, b1, w2, b2


if __name__ == "__main__":
    # Small shapes consistent with the module (constructor params scaled down).
    batch = 16
    input_size = 128
    hidden_size = 64
    num_classes = 2

    key = jax.random.PRNGKey(0)
    kx, kp = jax.random.split(key)
    x = jax.random.normal(kx, (batch, input_size), jnp.float32)
    w1, b1, w2, b2 = init_params(kp, input_size, hidden_size, num_classes)

    # Reference (pure JAX, eval-mode dropout = identity).
    ref = jnp.maximum(x @ w1 + b1, 0.0) @ w2 + b2

    # f32 path: exact semantics of the PyTorch module in eval mode.
    params_f32 = prepare_params(w1, b1, w2, b2)               # one-time prep
    logits = unstructured_classifier(x, *params_f32, num_classes=num_classes)
    logits = jax.block_until_ready(logits)
    assert logits.shape == (batch, num_classes)
    assert jnp.allclose(logits, ref, atol=1e-5, rtol=1e-5)

    # bf16 fast path: weights prepped once in bf16, x cast in-kernel,
    # f32 MXU accumulation — looser numerical check.
    params_bf16 = prepare_params(w1, b1, w2, b2, compute_dtype=jnp.bfloat16)
    logits_bf16 = unstructured_classifier(x, *params_bf16, num_classes=num_classes)
    logits_bf16 = jax.block_until_ready(logits_bf16)
    assert logits_bf16.shape == (batch, num_classes)
    assert jnp.allclose(logits_bf16, ref, atol=5e-2, rtol=5e-2)

    print("KERNEL_OK")
</pallas_src>

<mosaic_0001>
module attributes {stable_mosaic.version = 11 : i64} {
  func.func @_mlp_kernel(%arg0: i32, %arg1: memref<8x128xf32, #tpu.memory_space<vmem>>, %arg2: memref<128x128xf32, #tpu.memory_space<vmem>>, %arg3: memref<1x128xf32, #tpu.memory_space<vmem>>, %arg4: memref<128x128xf32, #tpu.memory_space<vmem>>, %arg5: memref<1x128xf32, #tpu.memory_space<vmem>>, %arg6: memref<8x128xf32, #tpu.memory_space<vmem>>) attributes {dimension_semantics = [#tpu.dimension_semantics<parallel>], iteration_bounds = array<i64: 2>, scalar_prefetch = 0 : i64, scratch_operands = 0 : i64, tpu.core_type = #tpu.core_type<tc>, window_params = [{transform_indices = @transform_0, window_bounds = array<i64: 8, 128>}, {pipeline_mode = #tpu.pipeline_mode<synchronous>, transform_indices = @transform_1, window_bounds = array<i64: 128, 128>}, {pipeline_mode = #tpu.pipeline_mode<synchronous>, transform_indices = @transform_2, window_bounds = array<i64: 1, 128>}, {pipeline_mode = #tpu.pipeline_mode<synchronous>, transform_indices = @transform_3, window_bounds = array<i64: 128, 128>}, {pipeline_mode = #tpu.pipeline_mode<synchronous>, transform_indices = @transform_4, window_bounds = array<i64: 1, 128>}, {transform_indices = @transform_5, window_bounds = array<i64: 8, 128>}]} {
    %c0 = arith.constant 0 : index
    %c0_0 = arith.constant 0 : index
    %0 = vector.load %arg1[%c0, %c0_0] : memref<8x128xf32, #tpu.memory_space<vmem>>, vector<8x128xf32>
    %c0_1 = arith.constant 0 : index
    %c0_2 = arith.constant 0 : index
    %1 = vector.load %arg2[%c0_1, %c0_2] : memref<128x128xf32, #tpu.memory_space<vmem>>, vector<128x128xf32>
    %cst = arith.constant dense<0.000000e+00> : vector<8x128xf32>
    %2 = tpu.matmul %0, %1, %cst {dimension_numbers = #tpu.dot_dimension_numbers<[1], [0], [0], [1], [0, 0, 1, 1], [], []>} : vector<8x128xf32>, vector<128x128xf32>, vector<8x128xf32> -> vector<8x128xf32>
    %c0_3 = arith.constant 0 : index
    %c0_4 = arith.constant 0 : index
    %3 = vector.load %arg3[%c0_3, %c0_4] : memref<1x128xf32, #tpu.memory_space<vmem>>, vector<1x128xf32>
    %4 = vector.broadcast %3 : vector<1x128xf32> to vector<8x128xf32>
    %5 = arith.addf %2, %4 : vector<8x128xf32>
    %cst_5 = arith.constant 0.000000e+00 : f32
    %6 = vector.broadcast %cst_5 : f32 to vector<8x128xf32>
    %7 = arith.maximumf %5, %6 : vector<8x128xf32>
    %c0_6 = arith.constant 0 : index
    %c0_7 = arith.constant 0 : index
    %8 = vector.load %arg4[%c0_6, %c0_7] : memref<128x128xf32, #tpu.memory_space<vmem>>, vector<128x128xf32>
    %cst_8 = arith.constant dense<0.000000e+00> : vector<8x128xf32>
    %9 = tpu.matmul %7, %8, %cst_8 {dimension_numbers = #tpu.dot_dimension_numbers<[1], [0], [0], [1], [0, 0, 1, 1], [], []>} : vector<8x128xf32>, vector<128x128xf32>, vector<8x128xf32> -> vector<8x128xf32>
    %c0_9 = arith.constant 0 : index
    %c0_10 = arith.constant 0 : index
    %10 = vector.load %arg5[%c0_9, %c0_10] : memref<1x128xf32, #tpu.memory_space<vmem>>, vector<1x128xf32>
    %11 = vector.broadcast %10 : vector<1x128xf32> to vector<8x128xf32>
    %12 = arith.addf %9, %11 : vector<8x128xf32>
    %c0_11 = arith.constant 0 : index
    %c0_12 = arith.constant 0 : index
    %13 = vector.load %arg6[%c0_11, %c0_12] : memref<8x128xf32, #tpu.memory_space<vmem>>, vector<8x128xf32>
    tpu.vector_store %arg6[%c0_11, %c0_12], %12 {strides = array<i32>} : memref<8x128xf32, #tpu.memory_space<vmem>>, vector<8x128xf32>,
    return
  }
  func.func @transform_0(%arg0: i32) -> (i32, i32) {
    %c0_i32 = arith.constant 0 : i32
    %c0_i32_0 = arith.constant 0 : i32
    return %arg0, %c0_i32 : i32, i32
  }
  func.func @transform_1(%arg0: i32) -> (i32, i32) {
    %c0_i32 = arith.constant 0 : i32
    %c0_i32_0 = arith.constant 0 : i32
    %c0_i32_1 = arith.constant 0 : i32
    return %c0_i32, %c0_i32_0 : i32, i32
  }
  func.func @transform_2(%arg0: i32) -> (i32, i32) {
    %c0_i32 = arith.constant 0 : i32
    %c0_i32_0 = arith.constant 0 : i32
    %c0_i32_1 = arith.constant 0 : i32
    return %c0_i32, %c0_i32_0 : i32, i32
  }
  func.func @transform_3(%arg0: i32) -> (i32, i32) {
    %c0_i32 = arith.constant 0 : i32
    %c0_i32_0 = arith.constant 0 : i32
    %c0_i32_1 = arith.constant 0 : i32
    return %c0_i32, %c0_i32_0 : i32, i32
  }
  func.func @transform_4(%arg0: i32) -> (i32, i32) {
    %c0_i32 = arith.constant 0 : i32
    %c0_i32_0 = arith.constant 0 : i32
    %c0_i32_1 = arith.constant 0 : i32
    return %c0_i32, %c0_i32_0 : i32, i32
  }
  func.func @transform_5(%arg0: i32) -> (i32, i32) {
    %c0_i32 = arith.constant 0 : i32
    %c0_i32_0 = arith.constant 0 : i32
    return %arg0, %c0_i32 : i32, i32
  }
}

</mosaic_0001>

<llo_original>
// kernel: unstructured_classifier.1
$region0: #{unstructured_classifier.1}
  #allocation0 [shape = 'u32[]', space=smem, size = 0x4, offset = 0x4, fixed_abs, tag = 'smem constant byte address 0x4 - core index']
  #allocation1 [shape = 'u32[144,128]{1,0:T(1,128)}', space=vmem, size = 0x12000, scoped, tag = 'internal scratch']
  %s0 = inlined_call_operand.hbm [shape: f32[16,128], index: 0, kind: input, shape index: {}]
  %s1 = inlined_call_operand.hbm [shape: f32[128,128], index: 1, kind: input, shape index: {}]
  %s2 = inlined_call_operand.vmem [shape: f32[1,128], index: 2, kind: input, shape index: {}]
  %s3 = inlined_call_operand.hbm [shape: f32[128,128], index: 3, kind: input, shape index: {}]
  %s4 = inlined_call_operand.vmem [shape: f32[1,128], index: 4, kind: input, shape index: {}]
  %s5 = inlined_call_operand.vmem [shape: f32[16,128], index: 5, kind: output, shape index: {}]
  %s6 = sld [smem:[#allocation0]]
  $region65: #{unstructured_classifier.1} parent=0
    _
  %s8 = ssub.s32 1, %s6
  %s9 = scalar_select 0, %s8, %s6
  $region1: #{unstructured_classifier.1} parent=0
    #allocation2 [shape = 'u8[8192]{0}', space=vmem, size = 0x2000, scoped, tag = 'input window, operand 0']
    #allocation3 [shape = 's32[2]{0}', space=sflag, size = 0x8, scoped, tag = 'scoped memory for unstructured_classifier.1']
    #allocation4 [shape = 'u8[65536]{0}', space=vmem, size = 0x10000, scoped, tag = 'input window, operand 1, single buffered']
    #allocation5 [shape = 's32[1]{0}', space=sflag, size = 0x4, scoped, tag = 'scoped memory for unstructured_classifier.1']
    #allocation6 [shape = 'u8[65536]{0}', space=vmem, size = 0x10000, scoped, tag = 'input window, operand 3, single buffered']
    %10 = vsyncpa [#allocation3], 0
    %s11 = scalar_lea.sflag [#allocation3], 1
    %12 = vsyncpa %s11, 0
    %13 = vsyncpa [#allocation5], 0
    loop: start=0, step=1, limit=4
    $region2: #{unstructured_classifier.1} parent=1 // loop_pre_header
      _
    $region3: #{unstructured_classifier.1} parent=1 // loop_header
      %s15 = sphi 0, %s19
      %p16 = scmp.ge.s32.totalorder %s15, 4
      %s25 = sphi 0, %s27
      %s28 = sphi 0, %s25
      %s29 = sphi 0, %s28
      %s45 = sphi 0, %s29
      %s49 = sphi 0, %s49
      %s51 = sphi 0, %s49
      %s52 = sphi 0, %s51
      %s66 = sphi 0, %s52
      %s70 = sphi 0, %s70
      %s72 = sphi 0, %s70
      %s73 = sphi 0, %s72
      %s87 = sphi 0, %s73
      %s91 = sphi 0, %s91
      %s93 = sphi 0, %s91
      %s94 = sphi 0, %s93
      %s108 = sphi 0, %s94
      %s112 = sphi 0, %s112
      %s114 = sphi 0, %s112
      %s115 = sphi 0, %s114
      %s129 = sphi 0, %s115
      %s135 = sphi 0, %s137
      %s138 = sphi 0, %s135
      %s139 = sphi 0, %s138
      %s155 = sphi 0, %s139
    $region4: #{unstructured_classifier.1} parent=1 // loop_header_branch
      %18 = sbr.rel (%p16) target = $region8
    $region5: #{unstructured_classifier.1} parent=1 // loop_body
      %s20 = ssub.s32 %s15, 1
      %s21 = ssub.s32 %s15, 2
      %s22 = sadd.s32 %s15, 1
      %s23 = ssub.s32 %s15, %s22
      %p24 = scmp.eq.s32.totalorder %s23, 0
      %s26 = sadd.s32 %s25, 1
      %s27 = scalar_select %p24, %s25, %s26
      %p30 = pneg %p24
      %p31 = scmp.eq.s32.totalorder %s15, 1
      %p32 = por %p30, %p31
      %p33 = scmp.ne.s32.totalorder %s25, %s28
      %p34 = scmp.eq.s32.totalorder %s15, 0
      %p35 = por %p33, %p34
      %p36 = scmp.ne.s32.totalorder %s25, %s28
      %p37 = scmp.eq.s32.totalorder %s20, 1
      %p38 = por %p36, %p37
      %p39 = scmp.ne.s32.totalorder %s28, %s29
      %p40 = scmp.eq.s32.totalorder %s20, 0
      %p41 = por %p39, %p40
      %p42 = scmp.ne.s32.totalorder %s28, %s29
      %p43 = scmp.eq.s32.totalorder %s21, 1
      %p44 = por %p42, %p43
      %p46 = scmp.ne.s32.totalorder %s29, %s45
      %p47 = scmp.eq.s32.totalorder %s21, 0
      %p48 = por %p46, %p47
      %s50 = sadd.s32 %s49, 1
      %p53 = scmp.eq.s32.totalorder %s15, 1
      %p54 = scmp.ne.s32.totalorder %s49, %s51
      %p55 = scmp.eq.s32.totalorder %s15, 0
      %p56 = por %p54, %p55
      %p57 = scmp.ne.s32.totalorder %s49, %s51
      %p58 = scmp.eq.s32.totalorder %s20, 1
      %p59 = por %p57, %p58
      %p60 = scmp.ne.s32.totalorder %s51, %s52
      %p61 = scmp.eq.s32.totalorder %s20, 0
      %p62 = por %p60, %p61
      %p63 = scmp.ne.s32.totalorder %s51, %s52
      %p64 = scmp.eq.s32.totalorder %s21, 1
      %p65 = por %p63, %p64
      %p67 = scmp.ne.s32.totalorder %s52, %s66
      %p68 = scmp.eq.s32.totalorder %s21, 0
      %p69 = por %p67, %p68
      %s71 = sadd.s32 %s70, 1
      %p74 = scmp.eq.s32.totalorder %s15, 1
      %p75 = scmp.ne.s32.totalorder %s70, %s72
      %p76 = scmp.eq.s32.totalorder %s15, 0
      %p77 = por %p75, %p76
      %p78 = scmp.ne.s32.totalorder %s70, %s72
      %p79 = scmp.eq.s32.totalorder %s20, 1
      %p80 = por %p78, %p79
      %p81 = scmp.ne.s32.totalorder %s72, %s73
      %p82 = scmp.eq.s32.totalorder %s20, 0
      %p83 = por %p81, %p82
      %p84 = scmp.ne.s32.totalorder %s72, %s73
      %p85 = scmp.eq.s32.totalorder %s21, 1
      %p86 = por %p84, %p85
      %p88 = scmp.ne.s32.totalorder %s73, %s87
      %p89 = scmp.eq.s32.totalorder %s21, 0
      %p90 = por %p88, %p89
      %s92 = sadd.s32 %s91, 1
      %p95 = scmp.eq.s32.totalorder %s15, 1
      %p96 = scmp.ne.s32.totalorder %s91, %s93
      %p97 = scmp.eq.s32.totalorder %s15, 0
      %p98 = por %p96, %p97
      %p99 = scmp.ne.s32.totalorder %s91, %s93
      %p100 = scmp.eq.s32.totalorder %s20, 1
      %p101 = por %p99, %p100
      %p102 = scmp.ne.s32.totalorder %s93, %s94
      %p103 = scmp.eq.s32.totalorder %s20, 0
      %p104 = por %p102, %p103
      %p105 = scmp.ne.s32.totalorder %s93, %s94
      %p106 = scmp.eq.s32.totalorder %s21, 1
      %p107 = por %p105, %p106
      %p109 = scmp.ne.s32.totalorder %s94, %s108
      %p110 = scmp.eq.s32.totalorder %s21, 0
      %p111 = por %p109, %p110
      %s113 = sadd.s32 %s112, 1
      %p116 = scmp.eq.s32.totalorder %s15, 1
      %p117 = scmp.ne.s32.totalorder %s112, %s114
      %p118 = scmp.eq.s32.totalorder %s15, 0
      %p119 = por %p117, %p118
      %p120 = scmp.ne.s32.totalorder %s112, %s114
      %p121 = scmp.eq.s32.totalorder %s20, 1
      %p122 = por %p120, %p121
      %p123 = scmp.ne.s32.totalorder %s114, %s115
      %p124 = scmp.eq.s32.totalorder %s20, 0
      %p125 = por %p123, %p124
      %p126 = scmp.ne.s32.totalorder %s114, %s115
      %p127 = scmp.eq.s32.totalorder %s21, 1
      %p128 = por %p126, %p127
      %p130 = scmp.ne.s32.totalorder %s115, %s129
      %p131 = scmp.eq.s32.totalorder %s21, 0
      %p132 = por %p130, %p131
      %s133 = ssub.s32 %s15, %s22
      %p134 = scmp.eq.s32.totalorder %s133, 0
      %s136 = sadd.s32 %s135, 1
      %s137 = scalar_select %p134, %s135, %s136
      %p140 = pneg %p134
      %p141 = scmp.eq.s32.totalorder %s15, 1
      %p142 = por %p140, %p141
      %p143 = scmp.ne.s32.totalorder %s135, %s138
      %p144 = scmp.eq.s32.totalorder %s15, 0
      %p145 = por %p143, %p144
      %p146 = scmp.ne.s32.totalorder %s135, %s138
      %p147 = scmp.eq.s32.totalorder %s20, 1
      %p148 = por %p146, %p147
      %p149 = scmp.ne.s32.totalorder %s138, %s139
      %p150 = scmp.eq.s32.totalorder %s20, 0
      %p151 = por %p149, %p150
      %p152 = scmp.ne.s32.totalorder %s138, %s139
      %p153 = scmp.eq.s32.totalorder %s21, 1
      %p154 = por %p152, %p153
      %p156 = scmp.ne.s32.totalorder %s139, %s155
      %p157 = scmp.eq.s32.totalorder %s21, 0
      %p158 = por %p156, %p157
      %p159 = scmp.le.s32.totalorder 1, %s15
      %p160 = scmp.lt.s32.totalorder %s15, 3
      %p161 = pnand %p159, %p160
      %p162 = pneg %p161
      // Predicated region
      $region9: #{unstructured_classifier.1} parent=5 // pred_check
        _
      $region10: #{unstructured_classifier.1} parent=5 // pred_check_branch
        %164 = sbr.rel (%p161) target = $region12
      $region11: #{unstructured_classifier.1} parent=5 // pred_region
        %s165 = ssub.s32 %s15, 1
        // Predicated region
        $region13: #{unstructured_classifier.1} parent=11 // pred_check
          %p166 = pneg %p62
        $region14: #{unstructured_classifier.1} parent=11 // pred_check_branch
          %168 = sbr.rel (%p166) target = $region16
        $region15: #{unstructured_classifier.1} parent=11 // pred_region
          %s170 = ssub.s32 2048, 2048
          %171 = vsyncadd [#allocation5], %s170
          %s172 = sshll.u32 [#allocation4], 4
          %s173 = int_to_ptr.vmem [resolvable:$true] %s172
          %178 = dma.hbm_to_vmem [thread:$0]  %s1, 2048, %s173, [#allocation5], 128, 128, 8
        $region16: #{unstructured_classifier.1} parent=11 // pred_fallthru
          _
        // Predicated region
        $region17: #{unstructured_classifier.1} parent=11 // pred_check
          %p179 = pneg %p83
        $region18: #{unstructured_classifier.1} parent=11 // pred_check_branch
          %181 = sbr.rel (%p179) target = $region20
        $region19: #{unstructured_classifier.1} parent=11 // pred_region
          _
        $region20: #{unstructured_classifier.1} parent=11 // pred_fallthru
          _
        // Predicated region
        $region21: #{unstructured_classifier.1} parent=11 // pred_check
          %p182 = pneg %p104
        $region22: #{unstructured_classifier.1} parent=11 // pred_check_branch
          %184 = sbr.rel (%p182) target = $region24
        $region23: #{unstructured_classifier.1} parent=11 // pred_region
          %s186 = ssub.s32 2048, 2048
          %187 = vsyncadd [#allocation5], %s186
          %s188 = sshll.u32 [#allocation6], 4
          %s189 = int_to_ptr.vmem [resolvable:$true] %s188
          %194 = dma.hbm_to_vmem [thread:$0]  %s3, 2048, %s189, [#allocation5], 128, 128, 8
        $region24: #{unstructured_classifier.1} parent=11 // pred_fallthru
          _
        // Predicated region
        $region25: #{unstructured_classifier.1} parent=11 // pred_check
          %p195 = pneg %p125
        $region26: #{unstructured_classifier.1} parent=11 // pred_check_branch
          %197 = sbr.rel (%p195) target = $region28
        $region27: #{unstructured_classifier.1} parent=11 // pred_region
          _
        $region28: #{unstructured_classifier.1} parent=11 // pred_fallthru
          _
      $region12: #{unstructured_classifier.1} parent=5 // pred_fallthru
        _
      %p198 = scmp.lt.s32.totalorder %s15, 2
      // Predicated region
      $region29: #{unstructured_classifier.1} parent=5 // pred_check
        %p199 = pneg %p198
      $region30: #{unstructured_classifier.1} parent=5 // pred_check_branch
        %201 = sbr.rel (%p199) target = $region32
      $region31: #{unstructured_classifier.1} parent=5 // pred_region
        // Predicated region
        $region33: #{unstructured_classifier.1} parent=31 // pred_check
          %p202 = pneg %p35
        $region34: #{unstructured_classifier.1} parent=31 // pred_check_branch
          %204 = sbr.rel (%p202) target = $region36
        $region35: #{unstructured_classifier.1} parent=31 // pred_region
          %s205 = sand.u32 %s25, 1
          %s206 = scalar_lea.sflag [#allocation3], %s205
          %s207 = sand.u32 %s25, 1
          %s208 = smul.addr %s207, 8
          %s209 = scalar_lea.vmem [#allocation2], %s208
          %s211 = ssub.s32 128, 128
          %212 = vsyncadd %s206, %s211
          %s213 = smul.addr %s15, 128
          %s214 = scalar_lea.hbm %s0, %s213
          %s216 = sshll.u32 %s209, 4
          %s217 = int_to_ptr.vmem [resolvable:$true] %s216
          %219 = dma.hbm_to_vmem [thread:$0]  %s214, 128, %s217, %s206
        $region36: #{unstructured_classifier.1} parent=31 // pred_fallthru
          _
      $region32: #{unstructured_classifier.1} parent=5 // pred_fallthru
        _
      %p220 = scmp.le.s32.totalorder 1, %s15
      %p221 = scmp.lt.s32.totalorder %s15, 3
      %p222 = pnand %p220, %p221
      %p223 = pneg %p222
      // Predicated region
      $region37: #{unstructured_classifier.1} parent=5 // pred_check
        _
      $region38: #{unstructured_classifier.1} parent=5 // pred_check_branch
        %225 = sbr.rel (%p222) target = $region40
      $region39: #{unstructured_classifier.1} parent=5 // pred_region
        %s226 = ssub.s32 %s15, 1
        %s227 = sand.u32 %s28, 1
        %s228 = scalar_lea.sflag [#allocation3], %s227
        %s229 = sand.u32 %s28, 1
        %s230 = smul.addr %s229, 8
        %s231 = scalar_lea.vmem [#allocation2], %s230
        // Predicated region
        $region41: #{unstructured_classifier.1} parent=39 // pred_check
          %p232 = pneg %p41
        $region42: #{unstructured_classifier.1} parent=39 // pred_check_branch
          %234 = sbr.rel (%p232) target = $region44
        $region43: #{unstructured_classifier.1} parent=39 // pred_region
          %235 = dma.done %s228, 128
        $region44: #{unstructured_classifier.1} parent=39 // pred_fallthru
          _
        // Predicated region
        $region45: #{unstructured_classifier.1} parent=39 // pred_check
          %p236 = pneg %p62
        $region46: #{unstructured_classifier.1} parent=39 // pred_check_branch
          %238 = sbr.rel (%p236) target = $region48
        $region47: #{unstructured_classifier.1} parent=39 // pred_region
          %239 = dma.done [#allocation5], 2048
        $region48: #{unstructured_classifier.1} parent=39 // pred_fallthru
          _
        // Predicated region
        $region49: #{unstructured_classifier.1} parent=39 // pred_check
          %p240 = pneg %p104
        $region50: #{unstructured_classifier.1} parent=39 // pred_check_branch
          %242 = sbr.rel (%p240) target = $region52
        $region51: #{unstructured_classifier.1} parent=39 // pred_region
          %243 = dma.done [#allocation5], 2048
        $region52: #{unstructured_classifier.1} parent=39 // pred_fallthru
          _
        %s244 = sand.u32 %s28, 1
        %s245 = scalar_lea.sflag [#allocation3], %s244
        %s246 = sand.u32 %s28, 1
        %s247 = smul.addr %s246, 8
        %s248 = scalar_lea.vmem [#allocation2], %s247
        %p249 = pneg %p41
        %p250 = pneg %p38
        %p251 = pneg %p62
        %p252 = pneg %p59
        %p253 = pneg %p83
        %p254 = pneg %p80
        %p255 = pneg %p104
        %p256 = pneg %p101
        %p257 = pneg %p125
        %p258 = pneg %p122
        %p259 = pneg %p151
        %p260 = pneg %p148
        %p261 = scmp.lt.s32.totalorder %s20, 1
        %s262 = scalar_select %p261, %s20, 1
        %s263 = smul.addr %s262, 8
        %s264 = scalar_lea.vmem %s5, %s263
        %p265 = scmp.lt.s32.totalorder %s20, 1
        %s266 = scalar_select %p265, %s20, 1
        %s267 = smul.addr %s266, 8
        %s268 = scalar_lea.vmem %s5, %s267
        %v269 = vld [vmem:[%s231] sm:$0xff]
        %v270 = vld [vmem:[#allocation4] sm:$0xff]
        %v271 = vld [vmem:[#allocation4 + $0x8] sm:$0xff]
        %v272 = vld [vmem:[#allocation4 + $0x10] sm:$0xff]
        %v273 = vld [vmem:[#allocation4 + $0x18] sm:$0xff]
        %v274 = vld [vmem:[#allocation4 + $0x20] sm:$0xff]
        %v275 = vld [vmem:[#allocation4 + $0x28] sm:$0xff]
        %v276 = vld [vmem:[#allocation4 + $0x30] sm:$0xff]
        %v277 = vld [vmem:[#allocation4 + $0x38] sm:$0xff]
        %v278 = vld [vmem:[#allocation4 + $0x40] sm:$0xff]
        %v279 = vld [vmem:[#allocation4 + $0x48] sm:$0xff]
        %v280 = vld [vmem:[#allocation4 + $0x50] sm:$0xff]
        %v281 = vld [vmem:[#allocation4 + $0x58] sm:$0xff]
        %v282 = vld [vmem:[#allocation4 + $0x60] sm:$0xff]
        %v283 = vld [vmem:[#allocation4 + $0x68] sm:$0xff]
        %v284 = vld [vmem:[#allocation4 + $0x70] sm:$0xff]
        %v285 = vld [vmem:[#allocation4 + $0x78] sm:$0xff]
        %v286 = vld [vmem:[%s2] sm:$0x1]
        %v288 = vlaneseq
        %v289 = vshrl.u32 %v288, 7
        %v290 = vsub.s32 0, %v289
        %v291 = vrot.slane %v286, %v290
        %293 = vmatprep.subr.mxu0 0.0
        %294 = vmatpush1.msra.mxu0 %v285
        %295 = vmatprep.subr.mxu0 0.0
        %296 = vmatpush1.msra.mxu0 %v284
        %297 = vmatprep.subr.mxu0 0.0
        %298 = vmatpush1.msra.mxu0 %v283
        %299 = vmatprep.subr.mxu0 0.0
        %300 = vmatpush1.msra.mxu0 %v282
        %301 = vmatprep.subr.mxu0 0.0
        %302 = vmatpush1.msra.mxu0 %v281
        %303 = vmatprep.subr.mxu0 0.0
        %304 = vmatpush1.msra.mxu0 %v280
        %305 = vmatprep.subr.mxu0 0.0
        %306 = vmatpush1.msra.mxu0 %v279
        %307 = vmatprep.subr.mxu0 0.0
        %308 = vmatpush1.msra.mxu0 %v278
        %309 = vmatprep.subr.mxu0 0.0
        %310 = vmatpush1.msra.mxu0 %v277
        %311 = vmatprep.subr.mxu0 0.0
        %312 = vmatpush1.msra.mxu0 %v276
        %313 = vmatprep.subr.mxu0 0.0
        %314 = vmatpush1.msra.mxu0 %v275
        %315 = vmatprep.subr.mxu0 0.0
        %316 = vmatpush1.msra.mxu0 %v274
        %317 = vmatprep.subr.mxu0 0.0
        %318 = vmatpush1.msra.mxu0 %v273
        %319 = vmatprep.subr.mxu0 0.0
        %320 = vmatpush1.msra.mxu0 %v272
        %321 = vmatprep.subr.mxu0 0.0
        %322 = vmatpush1.msra.mxu0 %v271
        %323 = vmatprep.subr.mxu0 0.0
        %324 = vmatpush1.msra.mxu0 %v270
        %325 = vmatprep.subr.mxu0 0.0
        %326 = vmatpush2.msra.mxu0 0.0
        %327 = vmatprep.subr.mxu0 0.0
        %328 = vmatpush2.msra.mxu0 0.0
        %329 = vmatprep.subr.mxu0 0.0
        %330 = vmatpush2.msra.mxu0 0.0
        %331 = vmatprep.subr.mxu0 0.0
        %332 = vmatpush2.msra.mxu0 0.0
        %333 = vmatprep.subr.mxu0 0.0
        %334 = vmatpush2.msra.mxu0 0.0
        %335 = vmatprep.subr.mxu0 0.0
        %336 = vmatpush2.msra.mxu0 0.0
        %337 = vmatprep.subr.mxu0 0.0
        %338 = vmatpush2.msra.mxu0 0.0
        %339 = vmatprep.subr.mxu0 0.0
        %340 = vmatpush2.msra.mxu0 0.0
        %341 = vmatprep.subr.mxu0 0.0
        %342 = vmatpush2.msra.mxu0 0.0
        %343 = vmatprep.subr.mxu0 0.0
        %344 = vmatpush2.msra.mxu0 0.0
        %345 = vmatprep.subr.mxu0 0.0
        %346 = vmatpush2.msra.mxu0 0.0
        %347 = vmatprep.subr.mxu0 0.0
        %348 = vmatpush2.msra.mxu0 0.0
        %349 = vmatprep.subr.mxu0 0.0
        %350 = vmatpush2.msra.mxu0 0.0
        %351 = vmatprep.subr.mxu0 0.0
        %352 = vmatpush2.msra.mxu0 0.0
        %353 = vmatprep.subr.mxu0 0.0
        %354 = vmatpush2.msra.mxu0 0.0
        %355 = vmatprep.subr.mxu0 0.0
        %356 = vmatpush2.msra.mxu0 0.0
        %357 = vmatprep.mubr.f32.mxu0 0.0
        %358 = vmatmul.mubr.f32.gmra.mxu0 %v269
        %v359 = vpop.f32.mrf.mxu0
        %v360 = vadd.f32 %v291, %v359
        %v361 = vpop.f32.mrf.mxu0
        %362 = vdwg.mxu0
        %v363 = vmax.f32 %v360, 0.0
        %v364 = vld [vmem:[#allocation6] sm:$0xff]
        %v365 = vld [vmem:[#allocation6 + $0x8] sm:$0xff]
        %v366 = vld [vmem:[#allocation6 + $0x10] sm:$0xff]
        %v367 = vld [vmem:[#allocation6 + $0x18] sm:$0xff]
        %v368 = vld [vmem:[#allocation6 + $0x20] sm:$0xff]
        %v369 = vld [vmem:[#allocation6 + $0x28] sm:$0xff]
        %v370 = vld [vmem:[#allocation6 + $0x30] sm:$0xff]
        %v371 = vld [vmem:[#allocation6 + $0x38] sm:$0xff]
        %v372 = vld [vmem:[#allocation6 + $0x40] sm:$0xff]
        %v373 = vld [vmem:[#allocation6 + $0x48] sm:$0xff]
        %v374 = vld [vmem:[#allocation6 + $0x50] sm:$0xff]
        %v375 = vld [vmem:[#allocation6 + $0x58] sm:$0xff]
        %v376 = vld [vmem:[#allocation6 + $0x60] sm:$0xff]
        %v377 = vld [vmem:[#allocation6 + $0x68] sm:$0xff]
        %v378 = vld [vmem:[#allocation6 + $0x70] sm:$0xff]
        %v379 = vld [vmem:[#allocation6 + $0x78] sm:$0xff]
        %v380 = vld [vmem:[%s4] sm:$0x1]
        %v382 = vlaneseq
        %v383 = vshrl.u32 %v382, 7
        %v384 = vsub.s32 0, %v383
        %v385 = vrot.slane %v380, %v384
        %387 = vmatprep.subr.mxu0 0.0
        %388 = vmatpush1.msra.mxu0 %v379
        %389 = vmatprep.subr.mxu0 0.0
        %390 = vmatpush1.msra.mxu0 %v378
        %391 = vmatprep.subr.mxu0 0.0
        %392 = vmatpush1.msra.mxu0 %v377
        %393 = vmatprep.subr.mxu0 0.0
        %394 = vmatpush1.msra.mxu0 %v376
        %395 = vmatprep.subr.mxu0 0.0
        %396 = vmatpush1.msra.mxu0 %v375
        %397 = vmatprep.subr.mxu0 0.0
        %398 = vmatpush1.msra.mxu0 %v374
        %399 = vmatprep.subr.mxu0 0.0
        %400 = vmatpush1.msra.mxu0 %v373
        %401 = vmatprep.subr.mxu0 0.0
        %402 = vmatpush1.msra.mxu0 %v372
        %403 = vmatprep.subr.mxu0 0.0
        %404 = vmatpush1.msra.mxu0 %v371
        %405 = vmatprep.subr.mxu0 0.0
        %406 = vmatpush1.msra.mxu0 %v370
        %407 = vmatprep.subr.mxu0 0.0
        %408 = vmatpush1.msra.mxu0 %v369
        %409 = vmatprep.subr.mxu0 0.0
        %410 = vmatpush1.msra.mxu0 %v368
        %411 = vmatprep.subr.mxu0 0.0
        %412 = vmatpush1.msra.mxu0 %v367
        %413 = vmatprep.subr.mxu0 0.0
        %414 = vmatpush1.msra.mxu0 %v366
        %415 = vmatprep.subr.mxu0 0.0
        %416 = vmatpush1.msra.mxu0 %v365
        %417 = vmatprep.subr.mxu0 0.0
        %418 = vmatpush1.msra.mxu0 %v364
        %419 = vmatprep.subr.mxu0 0.0
        %420 = vmatpush2.msra.mxu0 0.0
        %421 = vmatprep.subr.mxu0 0.0
        %422 = vmatpush2.msra.mxu0 0.0
        %423 = vmatprep.subr.mxu0 0.0
        %424 = vmatpush2.msra.mxu0 0.0
        %425 = vmatprep.subr.mxu0 0.0
        %426 = vmatpush2.msra.mxu0 0.0
        %427 = vmatprep.subr.mxu0 0.0
        %428 = vmatpush2.msra.mxu0 0.0
        %429 = vmatprep.subr.mxu0 0.0
        %430 = vmatpush2.msra.mxu0 0.0
        %431 = vmatprep.subr.mxu0 0.0
        %432 = vmatpush2.msra.mxu0 0.0
        %433 = vmatprep.subr.mxu0 0.0
        %434 = vmatpush2.msra.mxu0 0.0
        %435 = vmatprep.subr.mxu0 0.0
        %436 = vmatpush2.msra.mxu0 0.0
        %437 = vmatprep.subr.mxu0 0.0
        %438 = vmatpush2.msra.mxu0 0.0
        %439 = vmatprep.subr.mxu0 0.0
        %440 = vmatpush2.msra.mxu0 0.0
        %441 = vmatprep.subr.mxu0 0.0
        %442 = vmatpush2.msra.mxu0 0.0
        %443 = vmatprep.subr.mxu0 0.0
        %444 = vmatpush2.msra.mxu0 0.0
        %445 = vmatprep.subr.mxu0 0.0
        %446 = vmatpush2.msra.mxu0 0.0
        %447 = vmatprep.subr.mxu0 0.0
        %448 = vmatpush2.msra.mxu0 0.0
        %449 = vmatprep.subr.mxu0 0.0
        %450 = vmatpush2.msra.mxu0 0.0
        %451 = vmatprep.mubr.f32.mxu0 0.0
        %452 = vmatmul.mubr.f32.gmra.mxu0 %v363
        %v453 = vpop.f32.mrf.mxu0
        %v454 = vadd.f32 %v385, %v453
        %v455 = vpop.f32.mrf.mxu0
        %456 = vdwg.mxu0
        %457 = vst [vmem:[%s268] sm:$0xff] %v454
        %p458 = scmp.lt.s32.totalorder %s20, 1
        %s459 = scalar_select %p458, %s20, 1
        %s460 = smul.addr %s459, 8
        %s461 = scalar_lea.vmem %s5, %s460
        // Predicated region
        $region53: #{unstructured_classifier.1} parent=39 // pred_check
          %p462 = pneg %p148
        $region54: #{unstructured_classifier.1} parent=39 // pred_check_branch
          %464 = sbr.rel (%p462) target = $region56
        $region55: #{unstructured_classifier.1} parent=39 // pred_region
          _
        $region56: #{unstructured_classifier.1} parent=39 // pred_fallthru
          _
      $region40: #{unstructured_classifier.1} parent=5 // pred_fallthru
        _
      %p465 = scmp.le.s32.totalorder 2, %s15
      // Predicated region
      $region57: #{unstructured_classifier.1} parent=5 // pred_check
        %p466 = pneg %p465
      $region58: #{unstructured_classifier.1} parent=5 // pred_check_branch
        %468 = sbr.rel (%p466) target = $region60
      $region59: #{unstructured_classifier.1} parent=5 // pred_region
        %s469 = ssub.s32 %s15, 2
        // Predicated region
        $region61: #{unstructured_classifier.1} parent=59 // pred_check
          %p470 = pneg %p154
        $region62: #{unstructured_classifier.1} parent=59 // pred_check_branch
          %472 = sbr.rel (%p470) target = $region64
        $region63: #{unstructured_classifier.1} parent=59 // pred_region
          %p473 = scmp.lt.s32.totalorder %s21, 1
          %s474 = scalar_select %p473, %s21, 1
          %s475 = smul.addr %s474, 8
          %s476 = scalar_lea.vmem %s5, %s475
        $region64: #{unstructured_classifier.1} parent=59 // pred_fallthru
          _
      $region60: #{unstructured_classifier.1} parent=5 // pred_fallthru
        _
    $region6: #{unstructured_classifier.1} parent=1 // loop_footer
      %s19 = sadd.s32 1, %s15
    $region7: #{unstructured_classifier.1} parent=1 // loop_footer_branch
      %14 = sbr.rel target = $region3
    $region8: #{unstructured_classifier.1} parent=1 // loop_exit
      _
    %477 = vsyncpa [#allocation3], 1
    %s478 = scalar_lea.sflag [#allocation3], 1
    %479 = vsyncpa %s478, 1
    %480 = vsyncpa [#allocation5], 1

</llo_original>
